<compile_context>
chip_gen: v7x
topology: tpu7x:2x2x1
jax: 0.10.0
libtpu: 0.0.40
codegen_flags: <defaults>
</compile_context>

<pallas_src>
from functools import partial

import jax
import jax.numpy as jnp
from jax.experimental import pallas as pl
from jax.experimental.pallas import tpu as pltpu


def _dilation_kernel(x_ref, o_ref, rowbuf, colbuf, *, K, neutral):
    """x_ref/o_ref: (Bb, H, W) blocks.

    rowbuf: (Bb, H, W + 2*pad) VMEM scratch (horizontal pass, padded along W)
    colbuf: (Bb, H + 2*pad, W) VMEM scratch (vertical pass, padded along H)
    """
    pad = K // 2
    Bb, H, W = o_ref.shape
    dt = o_ref.dtype

    x = x_ref[...]

    # ---- 1 x K horizontal max pass (border handled in VMEM, not in HBM) ----
    rowbuf[...] = jnp.full(rowbuf.shape, neutral, dt)
    rowbuf[:, :, pad:pad + W] = x
    r = rowbuf[:, :, 0:W]
    for dj in range(1, K):                      # statically unrolled, K-1 maxes
        r = jnp.maximum(r, rowbuf[:, :, dj:dj + W])

    # ---- K x 1 vertical max pass ----
    colbuf[...] = jnp.full(colbuf.shape, neutral, dt)
    colbuf[:, pad:pad + H, :] = r
    m = colbuf[:, 0:H, :]
    for di in range(1, K):                      # statically unrolled, K-1 maxes
        m = jnp.maximum(m, colbuf[:, di:di + H, :])

    o_ref[...] = m


def _pick_block_slabs(n_slabs, slab_bytes, target_bytes=2 * 1024 * 1024):
    """Largest divisor of n_slabs whose block stays ~target_bytes and leaves
    >= 2 grid steps (so a 2-TensorCore chip can shard the parallel axis)."""
    want = max(1, min(n_slabs, target_bytes // max(1, slab_bytes)))
    if n_slabs >= 2:
        want = min(want, max(1, n_slabs // 2))
    for d in range(int(want), 0, -1):
        if n_slabs % d == 0:
            return d
    return 1


def dilation(img, kernel=3):
    """Max-filter (morphological dilation) on an NCHW image tensor."""
    kernel = int(kernel)
    if kernel < 1 or kernel % 2 == 0:
        # PIL's MaxFilter only accepts odd sizes.
        raise ValueError("MaxFilter kernel size must be a positive odd integer")
    N, C, H, W = img.shape
    K = kernel
    pad = K // 2

    B = N * C
    x = img.reshape(B, H, W)  # free: collapses contiguous leading dims

    slab_bytes = H * W * img.dtype.itemsize
    bb = _pick_block_slabs(B, slab_bytes)
    grid_b = B // bb

    # Border value: dtype minimum (== 0 for uint8 images, i.e. PIL's black).
    if jnp.issubdtype(img.dtype, jnp.floating):
        neutral = float("-inf")
    elif jnp.issubdtype(img.dtype, jnp.integer):
        neutral = int(jnp.iinfo(img.dtype).min)
    else:
        neutral = 0

    # Rough VMEM budget: double-buffered in+out blocks + the two scratch slabs.
    block_bytes = bb * H * W * img.dtype.itemsize
    scratch_bytes = bb * (H * (W + 2 * pad) + (H + 2 * pad) * W) * img.dtype.itemsize
    vmem_limit = int(min(64 * 1024 * 1024,                # v7x physical cap
                         max(32 * 1024 * 1024, 2 * (4 * block_bytes + scratch_bytes))))

    out = pl.pallas_call(
        partial(_dilation_kernel, K=K, neutral=neutral),
        out_shape=jax.ShapeDtypeStruct((B, H, W), img.dtype),
        grid=(grid_b,),
        in_specs=[pl.BlockSpec((bb, H, W), lambda b: (b, 0, 0))],
        out_specs=pl.BlockSpec((bb, H, W), lambda b: (b, 0, 0)),
        scratch_shapes=[
            pltpu.VMEM((bb, H, W + 2 * pad), img.dtype),
            pltpu.VMEM((bb, H + 2 * pad, W), img.dtype),
        ],
        compiler_params=pltpu.CompilerParams(
            dimension_semantics=("parallel",),
            vmem_limit_bytes=vmem_limit,
        ),
    )(x)
    # TODO(synk): for very small W a lane-dense (channels-in-lanes) layout
    # would avoid masked 16-lane stores, but it requires an NCHW->NHWC HBM
    # transpose pass that costs more than it saves at these sizes.
    return out.reshape(N, C, H, W)


def _reference(img, kernel=3):
    # pure-JAX reference: sliding-window max with SAME padding (-inf border).
    return jax.lax.reduce_window(
        img, -jnp.inf, jax.lax.max,
        window_dimensions=(1, 1, kernel, kernel),
        window_strides=(1, 1, 1, 1),
        padding="SAME",
    ).astype(img.dtype)


if __name__ == "__main__":
    key = jax.random.PRNGKey(0)
    # small NCHW image batch, non-negative values like normalized pixels
    x = jax.random.uniform(key, (2, 4, 16, 16), dtype=jnp.float32)

    out = jax.block_until_ready(dilation(x, kernel=3))
    ref = _reference(x, kernel=3)
    assert out.shape == ref.shape and out.dtype == ref.dtype
    assert jnp.allclose(out, ref), "Pallas dilation mismatch vs reference (K=3)"

    # extra check: signed data + larger window (exercises dtype-min border)
    x2 = jax.random.normal(jax.random.PRNGKey(1), (2, 3, 16, 16), dtype=jnp.float32)
    out2 = jax.block_until_ready(dilation(x2, kernel=5))
    ref2 = _reference(x2, kernel=5)
    assert jnp.allclose(out2, ref2), "Pallas dilation mismatch vs reference (K=5)"

    print("KERNEL_OK")
</pallas_src>

<mosaic_0001>
module attributes {stable_mosaic.version = 11 : i64} {
  func.func @_dilation_kernel(%arg0: i32, %arg1: memref<4x16x16xf32, #tpu.memory_space<vmem>>, %arg2: memref<4x16x16xf32, #tpu.memory_space<vmem>>, %arg3: memref<4x16x18xf32, #tpu.memory_space<vmem>>, %arg4: memref<4x18x16xf32, #tpu.memory_space<vmem>>) attributes {dimension_semantics = [#tpu.dimension_semantics<parallel>], iteration_bounds = array<i64: 2>, scalar_prefetch = 0 : i64, scratch_operands = 2 : i64, tpu.core_type = #tpu.core_type<tc>, window_params = [{transform_indices = @transform_0, window_bounds = array<i64: 4, 16, 16>}, {transform_indices = @transform_1, window_bounds = array<i64: 4, 16, 16>}]} {
    %c0 = arith.constant 0 : index
    %c0_0 = arith.constant 0 : index
    %c0_1 = arith.constant 0 : index
    %0 = vector.load %arg1[%c0, %c0_0, %c0_1] : memref<4x16x16xf32, #tpu.memory_space<vmem>>, vector<4x16x16xf32>
    %cst = arith.constant 0xFF800000 : f32
    %1 = vector.broadcast %cst : f32 to vector<4x16x18xf32>
    %c0_2 = arith.constant 0 : index
    %c0_3 = arith.constant 0 : index
    %c0_4 = arith.constant 0 : index
    %2 = vector.load %arg3[%c0_2, %c0_3, %c0_4] : memref<4x16x18xf32, #tpu.memory_space<vmem>>, vector<4x16x18xf32>
    tpu.vector_store %arg3[%c0_2, %c0_3, %c0_4], %1 {strides = array<i32>} : memref<4x16x18xf32, #tpu.memory_space<vmem>>, vector<4x16x18xf32>,
    %c0_5 = arith.constant 0 : index
    %c0_6 = arith.constant 0 : index
    %c1 = arith.constant 1 : index
    %3 = vector.load %arg3[%c0_5, %c0_6, %c1] : memref<4x16x18xf32, #tpu.memory_space<vmem>>, vector<4x16x16xf32>
    tpu.vector_store %arg3[%c0_5, %c0_6, %c1], %0 {strides = array<i32>} : memref<4x16x18xf32, #tpu.memory_space<vmem>>, vector<4x16x16xf32>,
    %c0_7 = arith.constant 0 : index
    %c0_8 = arith.constant 0 : index
    %c0_9 = arith.constant 0 : index
    %4 = vector.load %arg3[%c0_7, %c0_8, %c0_9] : memref<4x16x18xf32, #tpu.memory_space<vmem>>, vector<4x16x16xf32>
    %c0_10 = arith.constant 0 : index
    %c0_11 = arith.constant 0 : index
    %c1_12 = arith.constant 1 : index
    %5 = vector.load %arg3[%c0_10, %c0_11, %c1_12] : memref<4x16x18xf32, #tpu.memory_space<vmem>>, vector<4x16x16xf32>
    %6 = arith.maximumf %4, %5 : vector<4x16x16xf32>
    %c0_13 = arith.constant 0 : index
    %c0_14 = arith.constant 0 : index
    %c2 = arith.constant 2 : index
    %7 = vector.load %arg3[%c0_13, %c0_14, %c2] : memref<4x16x18xf32, #tpu.memory_space<vmem>>, vector<4x16x16xf32>
    %8 = arith.maximumf %6, %7 : vector<4x16x16xf32>
    %cst_15 = arith.constant 0xFF800000 : f32
    %9 = vector.broadcast %cst_15 : f32 to vector<4x18x16xf32>
    %c0_16 = arith.constant 0 : index
    %c0_17 = arith.constant 0 : index
    %c0_18 = arith.constant 0 : index
    %10 = vector.load %arg4[%c0_16, %c0_17, %c0_18] : memref<4x18x16xf32, #tpu.memory_space<vmem>>, vector<4x18x16xf32>
    tpu.vector_store %arg4[%c0_16, %c0_17, %c0_18], %9 {strides = array<i32>} : memref<4x18x16xf32, #tpu.memory_space<vmem>>, vector<4x18x16xf32>,
    %c0_19 = arith.constant 0 : index
    %c1_20 = arith.constant 1 : index
    %c0_21 = arith.constant 0 : index
    %11 = vector.load %arg4[%c0_19, %c1_20, %c0_21] : memref<4x18x16xf32, #tpu.memory_space<vmem>>, vector<4x16x16xf32>
    tpu.vector_store %arg4[%c0_19, %c1_20, %c0_21], %8 {strides = array<i32>} : memref<4x18x16xf32, #tpu.memory_space<vmem>>, vector<4x16x16xf32>,
    %c0_22 = arith.constant 0 : index
    %c0_23 = arith.constant 0 : index
    %c0_24 = arith.constant 0 : index
    %12 = vector.load %arg4[%c0_22, %c0_23, %c0_24] : memref<4x18x16xf32, #tpu.memory_space<vmem>>, vector<4x16x16xf32>
    %c0_25 = arith.constant 0 : index
    %c1_26 = arith.constant 1 : index
    %c0_27 = arith.constant 0 : index
    %13 = vector.load %arg4[%c0_25, %c1_26, %c0_27] : memref<4x18x16xf32, #tpu.memory_space<vmem>>, vector<4x16x16xf32>
    %14 = arith.maximumf %12, %13 : vector<4x16x16xf32>
    %c0_28 = arith.constant 0 : index
    %c2_29 = arith.constant 2 : index
    %c0_30 = arith.constant 0 : index
    %15 = vector.load %arg4[%c0_28, %c2_29, %c0_30] : memref<4x18x16xf32, #tpu.memory_space<vmem>>, vector<4x16x16xf32>
    %16 = arith.maximumf %14, %15 : vector<4x16x16xf32>
    %c0_31 = arith.constant 0 : index
    %c0_32 = arith.constant 0 : index
    %c0_33 = arith.constant 0 : index
    %17 = vector.load %arg2[%c0_31, %c0_32, %c0_33] : memref<4x16x16xf32, #tpu.memory_space<vmem>>, vector<4x16x16xf32>
    tpu.vector_store %arg2[%c0_31, %c0_32, %c0_33], %16 {strides = array<i32>} : memref<4x16x16xf32, #tpu.memory_space<vmem>>, vector<4x16x16xf32>,
    return
  }
  func.func @transform_0(%arg0: i32) -> (i32, i32, i32) {
    %c0_i32 = arith.constant 0 : i32
    %c0_i32_0 = arith.constant 0 : i32
    %c0_i32_1 = arith.constant 0 : i32
    return %arg0, %c0_i32, %c0_i32_0 : i32, i32, i32
  }
  func.func @transform_1(%arg0: i32) -> (i32, i32, i32) {
    %c0_i32 = arith.constant 0 : i32
    %c0_i32_0 = arith.constant 0 : i32
    %c0_i32_1 = arith.constant 0 : i32
    return %arg0, %c0_i32, %c0_i32_0 : i32, i32, i32
  }
}

</mosaic_0001>

<llo_original>
// kernel: tpu_custom_call.1
$region0: #{tpu_custom_call.1}
  #allocation0 [shape = 'u32[]', space=smem, size = 0x4, offset = 0x4, fixed_abs, tag = 'smem constant byte address 0x4 - core index']
  #allocation1 [shape = 'u32[144,128]{1,0:T(1,128)}', space=vmem, size = 0x12000, scoped, tag = 'internal scratch']
  #allocation2 [shape = 'f32[4,16,18]{2,1,0:T(8,128)}', space=vmem, size = 0x8000, scoped, tag = 'scratch operand']
  #allocation3 [shape = 'f32[4,18,16]{2,1,0:T(8,128)}', space=vmem, size = 0xc000, scoped, tag = 'scratch operand']
  %s0 = inlined_call_operand.hbm [shape: f32[8,16,16], index: 0, kind: input, shape index: {}]
  %s1 = inlined_call_operand.hbm [shape: f32[8,16,16], index: 1, kind: output, shape index: {}]
  %s2 = sld [smem:[#allocation0]]
  $region41: #{tpu_custom_call.1} parent=0
    _
  %s4 = ssub.s32 1, %s2
  %s5 = scalar_select 0, %s4, %s2
  $region1: #{tpu_custom_call.1} parent=0
    #allocation4 [shape = 'u8[65536]{0}', space=vmem, size = 0x10000, scoped, tag = 'input window, operand 0']
    #allocation5 [shape = 's32[2]{0}', space=sflag, size = 0x8, scoped, tag = 'scoped memory for tpu_custom_call.1']
    #allocation6 [shape = 's32[2]{0}', space=sflag, size = 0x8, scoped, tag = 'scoped memory for tpu_custom_call.1']
    #allocation7 [shape = 'u8[65536]{0}', space=vmem, size = 0x10000, scoped, tag = 'output window, operand 0']
    %6 = vsyncpa [#allocation5], 0
    %s7 = scalar_lea.sflag [#allocation5], 1
    %8 = vsyncpa %s7, 0
    %9 = vsyncpa [#allocation6], 0
    %s10 = scalar_lea.sflag [#allocation6], 1
    %11 = vsyncpa %s10, 0
    loop: start=0, step=1, limit=4
    $region2: #{tpu_custom_call.1} parent=1 // loop_pre_header
      _
    $region3: #{tpu_custom_call.1} parent=1 // loop_header
      %s13 = sphi 0, %s17
      %p14 = scmp.ge.s32.totalorder %s13, 4
      %s23 = sphi 0, %s25
      %s26 = sphi 0, %s23
      %s27 = sphi 0, %s26
      %s43 = sphi 0, %s27
      %s49 = sphi 0, %s51
      %s52 = sphi 0, %s49
      %s53 = sphi 0, %s52
      %s69 = sphi 0, %s53
    $region4: #{tpu_custom_call.1} parent=1 // loop_header_branch
      %16 = sbr.rel (%p14) target = $region8
    $region5: #{tpu_custom_call.1} parent=1 // loop_body
      %s18 = ssub.s32 %s13, 1
      %s19 = ssub.s32 %s13, 2
      %s20 = sadd.s32 %s13, 1
      %s21 = ssub.s32 %s13, %s20
      %p22 = scmp.eq.s32.totalorder %s21, 0
      %s24 = sadd.s32 %s23, 1
      %s25 = scalar_select %p22, %s23, %s24
      %p28 = pneg %p22
      %p29 = scmp.eq.s32.totalorder %s13, 1
      %p30 = por %p28, %p29
      %p31 = scmp.ne.s32.totalorder %s23, %s26
      %p32 = scmp.eq.s32.totalorder %s13, 0
      %p33 = por %p31, %p32
      %p34 = scmp.ne.s32.totalorder %s23, %s26
      %p35 = scmp.eq.s32.totalorder %s18, 1
      %p36 = por %p34, %p35
      %p37 = scmp.ne.s32.totalorder %s26, %s27
      %p38 = scmp.eq.s32.totalorder %s18, 0
      %p39 = por %p37, %p38
      %p40 = scmp.ne.s32.totalorder %s26, %s27
      %p41 = scmp.eq.s32.totalorder %s19, 1
      %p42 = por %p40, %p41
      %p44 = scmp.ne.s32.totalorder %s27, %s43
      %p45 = scmp.eq.s32.totalorder %s19, 0
      %p46 = por %p44, %p45
      %s47 = ssub.s32 %s13, %s20
      %p48 = scmp.eq.s32.totalorder %s47, 0
      %s50 = sadd.s32 %s49, 1
      %s51 = scalar_select %p48, %s49, %s50
      %p54 = pneg %p48
      %p55 = scmp.eq.s32.totalorder %s13, 1
      %p56 = por %p54, %p55
      %p57 = scmp.ne.s32.totalorder %s49, %s52
      %p58 = scmp.eq.s32.totalorder %s13, 0
      %p59 = por %p57, %p58
      %p60 = scmp.ne.s32.totalorder %s49, %s52
      %p61 = scmp.eq.s32.totalorder %s18, 1
      %p62 = por %p60, %p61
      %p63 = scmp.ne.s32.totalorder %s52, %s53
      %p64 = scmp.eq.s32.totalorder %s18, 0
      %p65 = por %p63, %p64
      %p66 = scmp.ne.s32.totalorder %s52, %s53
      %p67 = scmp.eq.s32.totalorder %s19, 1
      %p68 = por %p66, %p67
      %p70 = scmp.ne.s32.totalorder %s53, %s69
      %p71 = scmp.eq.s32.totalorder %s19, 0
      %p72 = por %p70, %p71
      %p73 = scmp.le.s32.totalorder 1, %s13
      %p74 = scmp.lt.s32.totalorder %s13, 3
      %p75 = pnand %p73, %p74
      %p76 = pneg %p75
      // Predicated region
      $region9: #{tpu_custom_call.1} parent=5 // pred_check
        _
      $region10: #{tpu_custom_call.1} parent=5 // pred_check_branch
        %78 = sbr.rel (%p75) target = $region12
      $region11: #{tpu_custom_call.1} parent=5 // pred_region
        %s79 = ssub.s32 %s13, 1
      $region12: #{tpu_custom_call.1} parent=5 // pred_fallthru
        _
      %p80 = scmp.lt.s32.totalorder %s13, 2
      // Predicated region
      $region13: #{tpu_custom_call.1} parent=5 // pred_check
        %p81 = pneg %p80
      $region14: #{tpu_custom_call.1} parent=5 // pred_check_branch
        %83 = sbr.rel (%p81) target = $region16
      $region15: #{tpu_custom_call.1} parent=5 // pred_region
        // Predicated region
        $region17: #{tpu_custom_call.1} parent=15 // pred_check
          %p84 = pneg %p33
        $region18: #{tpu_custom_call.1} parent=15 // pred_check_branch
          %86 = sbr.rel (%p84) target = $region20
        $region19: #{tpu_custom_call.1} parent=15 // pred_region
          %s87 = sand.u32 %s23, 1
          %s88 = scalar_lea.sflag [#allocation5], %s87
          %s89 = sand.u32 %s23, 1
          %s90 = smul.addr %s89, 64
          %s91 = scalar_lea.vmem [#allocation4], %s90
          %s92 = smul.u32 4, %s13
          %s94 = ssub.s32 1024, 1024
          %95 = vsyncadd %s88, %s94
          %s96 = smul.addr %s92, 2
          %s97 = smul.addr %s96, 128
          %s98 = scalar_lea.hbm %s0, %s97
          %s99 = sshll.u32 %s91, 4
          %s100 = int_to_ptr.vmem [resolvable:$true] %s99
          %105 = dma.hbm_to_vmem [thread:$0]  %s98, 1024, %s100, %s88, 128, 128, 8
        $region20: #{tpu_custom_call.1} parent=15 // pred_fallthru
          _
      $region16: #{tpu_custom_call.1} parent=5 // pred_fallthru
        _
      %p106 = scmp.le.s32.totalorder 1, %s13
      %p107 = scmp.lt.s32.totalorder %s13, 3
      %p108 = pnand %p106, %p107
      %p109 = pneg %p108
      // Predicated region
      $region21: #{tpu_custom_call.1} parent=5 // pred_check
        _
      $region22: #{tpu_custom_call.1} parent=5 // pred_check_branch
        %111 = sbr.rel (%p108) target = $region24
      $region23: #{tpu_custom_call.1} parent=5 // pred_region
        %s112 = ssub.s32 %s13, 1
        %s113 = sand.u32 %s26, 1
        %s114 = scalar_lea.sflag [#allocation5], %s113
        %s115 = sand.u32 %s26, 1
        %s116 = smul.addr %s115, 64
        %s117 = scalar_lea.vmem [#allocation4], %s116
        // Predicated region
        $region25: #{tpu_custom_call.1} parent=23 // pred_check
          %p118 = pneg %p39
        $region26: #{tpu_custom_call.1} parent=23 // pred_check_branch
          %120 = sbr.rel (%p118) target = $region28
        $region27: #{tpu_custom_call.1} parent=23 // pred_region
          %121 = dma.done %s114, 1024
        $region28: #{tpu_custom_call.1} parent=23 // pred_fallthru
          _
        %s122 = sand.u32 %s26, 1
        %s123 = scalar_lea.sflag [#allocation5], %s122
        %s124 = sand.u32 %s26, 1
        %s125 = smul.addr %s124, 64
        %s126 = scalar_lea.vmem [#allocation4], %s125
        %p127 = pneg %p39
        %p128 = pneg %p36
        %p129 = pneg %p65
        %p130 = pneg %p62
        %s131 = sand.u32 %s52, 1
        %s132 = scalar_lea.sflag [#allocation6], %s131
        %s133 = sand.u32 %s52, 1
        %s134 = smul.addr %s133, 64
        %s135 = scalar_lea.vmem [#allocation7], %s134
        %s136 = smul.u32 4, %s18
        %s137 = smul.u32 4, %s18
        %v138 = vld [vmem:[%s117] sm:$0xff]
        %v139 = vld [vmem:[%s117 + $0x8] sm:$0xff]
        %v140 = vld [vmem:[%s117 + $0x10] sm:$0xff]
        %v141 = vld [vmem:[%s117 + $0x18] sm:$0xff]
        %v142 = vld [vmem:[%s117 + $0x20] sm:$0xff]
        %v143 = vld [vmem:[%s117 + $0x28] sm:$0xff]
        %v144 = vld [vmem:[%s117 + $0x30] sm:$0xff]
        %v145 = vld [vmem:[%s117 + $0x38] sm:$0xff]
        %vm146 = vcmask 146432
        %147 = vst.msk [vmem:[#allocation2] sm:$0xff] %vm146, -inf
        %148 = vst.msk [vmem:[#allocation2 + $0x8] sm:$0xff] %vm146, -inf
        %149 = vst.msk [vmem:[#allocation2 + $0x10] sm:$0xff] %vm146, -inf
        %150 = vst.msk [vmem:[#allocation2 + $0x18] sm:$0xff] %vm146, -inf
        %151 = vst.msk [vmem:[#allocation2 + $0x20] sm:$0xff] %vm146, -inf
        %152 = vst.msk [vmem:[#allocation2 + $0x28] sm:$0xff] %vm146, -inf
        %153 = vst.msk [vmem:[#allocation2 + $0x30] sm:$0xff] %vm146, -inf
        %154 = vst.msk [vmem:[#allocation2 + $0x38] sm:$0xff] %vm146, -inf
        %163 = vrot.lane.b32.xlu0 %v138, 1
        %v164 = vpop.permute.xlu0 %163
        %165 = vrot.lane.b32.xlu0 %v139, 1
        %v166 = vpop.permute.xlu0 %165
        %167 = vrot.lane.b32.xlu0 %v140, 1
        %v168 = vpop.permute.xlu0 %167
        %169 = vrot.lane.b32.xlu0 %v141, 1
        %v170 = vpop.permute.xlu0 %169
        %171 = vrot.lane.b32.xlu0 %v142, 1
        %v172 = vpop.permute.xlu0 %171
        %173 = vrot.lane.b32.xlu0 %v143, 1
        %v174 = vpop.permute.xlu0 %173
        %175 = vrot.lane.b32.xlu0 %v144, 1
        %v176 = vpop.permute.xlu0 %175
        %177 = vrot.lane.b32.xlu0 %v145, 1
        %v178 = vpop.permute.xlu0 %177
        %vm187 = vcmask 138248
        %188 = vst.msk [vmem:[#allocation2] sm:$0xff] %vm187, %v164
        %189 = vst.msk [vmem:[#allocation2 + $0x8] sm:$0xff] %vm187, %v166
        %190 = vst.msk [vmem:[#allocation2 + $0x10] sm:$0xff] %vm187, %v168
        %191 = vst.msk [vmem:[#allocation2 + $0x18] sm:$0xff] %vm187, %v170
        %192 = vst.msk [vmem:[#allocation2 + $0x20] sm:$0xff] %vm187, %v172
        %193 = vst.msk [vmem:[#allocation2 + $0x28] sm:$0xff] %vm187, %v174
        %194 = vst.msk [vmem:[#allocation2 + $0x30] sm:$0xff] %vm187, %v176
        %195 = vst.msk [vmem:[#allocation2 + $0x38] sm:$0xff] %vm187, %v178
        %v196 = vld [vmem:[#allocation2] sm:$0xff]
        %v197 = vld [vmem:[#allocation2 + $0x8] sm:$0xff]
        %v198 = vld [vmem:[#allocation2 + $0x10] sm:$0xff]
        %v199 = vld [vmem:[#allocation2 + $0x18] sm:$0xff]
        %v200 = vld [vmem:[#allocation2 + $0x20] sm:$0xff]
        %v201 = vld [vmem:[#allocation2 + $0x28] sm:$0xff]
        %v202 = vld [vmem:[#allocation2 + $0x30] sm:$0xff]
        %v203 = vld [vmem:[#allocation2 + $0x38] sm:$0xff]
        %212 = vrot.lane.b32.xlu0 %v196, 127
        %v213 = vpop.permute.xlu0 %212
        %214 = vrot.lane.b32.xlu0 %v197, 127
        %v215 = vpop.permute.xlu0 %214
        %216 = vrot.lane.b32.xlu0 %v198, 127
        %v217 = vpop.permute.xlu0 %216
        %218 = vrot.lane.b32.xlu0 %v199, 127
        %v219 = vpop.permute.xlu0 %218
        %220 = vrot.lane.b32.xlu0 %v200, 127
        %v221 = vpop.permute.xlu0 %220
        %222 = vrot.lane.b32.xlu0 %v201, 127
        %v223 = vpop.permute.xlu0 %222
        %224 = vrot.lane.b32.xlu0 %v202, 127
        %v225 = vpop.permute.xlu0 %224
        %226 = vrot.lane.b32.xlu0 %v203, 127
        %v227 = vpop.permute.xlu0 %226
        %v236 = vmax.f32 %v196, %v213
        %v237 = vmax.f32 %v197, %v215
        %v238 = vmax.f32 %v198, %v217
        %v239 = vmax.f32 %v199, %v219
        %v240 = vmax.f32 %v200, %v221
        %v241 = vmax.f32 %v201, %v223
        %v242 = vmax.f32 %v202, %v225
        %v243 = vmax.f32 %v203, %v227
        %244 = vrot.lane.b32.xlu0 %v196, 126
        %v245 = vpop.permute.xlu0 %244
        %246 = vrot.lane.b32.xlu0 %v197, 126
        %v247 = vpop.permute.xlu0 %246
        %248 = vrot.lane.b32.xlu0 %v198, 126
        %v249 = vpop.permute.xlu0 %248
        %250 = vrot.lane.b32.xlu0 %v199, 126
        %v251 = vpop.permute.xlu0 %250
        %252 = vrot.lane.b32.xlu0 %v200, 126
        %v253 = vpop.permute.xlu0 %252
        %254 = vrot.lane.b32.xlu0 %v201, 126
        %v255 = vpop.permute.xlu0 %254
        %256 = vrot.lane.b32.xlu0 %v202, 126
        %v257 = vpop.permute.xlu0 %256
        %258 = vrot.lane.b32.xlu0 %v203, 126
        %v259 = vpop.permute.xlu0 %258
        %v268 = vmax.f32 %v236, %v245
        %v269 = vmax.f32 %v237, %v247
        %v270 = vmax.f32 %v238, %v249
        %v271 = vmax.f32 %v239, %v251
        %v272 = vmax.f32 %v240, %v253
        %v273 = vmax.f32 %v241, %v255
        %v274 = vmax.f32 %v242, %v257
        %v275 = vmax.f32 %v243, %v259
        %vm276 = vcmask 130048
        %277 = vst.msk [vmem:[#allocation3] sm:$0xff] %vm276, -inf
        %278 = vst.msk [vmem:[#allocation3 + $0x8] sm:$0xff] %vm276, -inf
        %vm279 = vcmask 123904
        %280 = vst.msk [vmem:[#allocation3 + $0x10] sm:$0x3] %vm279, -inf
        %281 = vst.msk [vmem:[#allocation3 + $0x18] sm:$0xff] %vm276, -inf
        %282 = vst.msk [vmem:[#allocation3 + $0x20] sm:$0xff] %vm276, -inf
        %283 = vst.msk [vmem:[#allocation3 + $0x28] sm:$0x3] %vm279, -inf
        %284 = vst.msk [vmem:[#allocation3 + $0x30] sm:$0xff] %vm276, -inf
        %285 = vst.msk [vmem:[#allocation3 + $0x38] sm:$0xff] %vm276, -inf
        %286 = vst.msk [vmem:[#allocation3 + $0x40] sm:$0x3] %vm279, -inf
        %287 = vst.msk [vmem:[#allocation3 + $0x48] sm:$0xff] %vm276, -inf
        %288 = vst.msk [vmem:[#allocation3 + $0x50] sm:$0xff] %vm276, -inf
        %289 = vst.msk [vmem:[#allocation3 + $0x58] sm:$0x3] %vm279, -inf
        %290 = vst.msk [vmem:[#allocation3 + $0x1] sm:$0xff] %vm276, %v268
        %291 = vst.msk [vmem:[#allocation3 + $0x9] sm:$0xff] %vm276, %v269
        %292 = vst.msk [vmem:[#allocation3 + $0x19] sm:$0xff] %vm276, %v270
        %293 = vst.msk [vmem:[#allocation3 + $0x21] sm:$0xff] %vm276, %v271
        %294 = vst.msk [vmem:[#allocation3 + $0x31] sm:$0xff] %vm276, %v272
        %295 = vst.msk [vmem:[#allocation3 + $0x39] sm:$0xff] %vm276, %v273
        %296 = vst.msk [vmem:[#allocation3 + $0x49] sm:$0xff] %vm276, %v274
        %297 = vst.msk [vmem:[#allocation3 + $0x51] sm:$0xff] %vm276, %v275
        %v298 = vld [vmem:[#allocation3] sm:$0xff]
        %v299 = vld [vmem:[#allocation3 + $0x8] sm:$0xff]
        %v300 = vld [vmem:[#allocation3 + $0x18] sm:$0xff]
        %v301 = vld [vmem:[#allocation3 + $0x20] sm:$0xff]
        %v302 = vld [vmem:[#allocation3 + $0x30] sm:$0xff]
        %v303 = vld [vmem:[#allocation3 + $0x38] sm:$0xff]
        %v304 = vld [vmem:[#allocation3 + $0x48] sm:$0xff]
        %v305 = vld [vmem:[#allocation3 + $0x50] sm:$0xff]
        %v306 = vld [vmem:[#allocation3 + $0x1] sm:$0xff]
        %v307 = vld [vmem:[#allocation3 + $0x9] sm:$0xff]
        %v308 = vld [vmem:[#allocation3 + $0x19] sm:$0xff]
        %v309 = vld [vmem:[#allocation3 + $0x21] sm:$0xff]
        %v310 = vld [vmem:[#allocation3 + $0x31] sm:$0xff]
        %v311 = vld [vmem:[#allocation3 + $0x39] sm:$0xff]
        %v312 = vld [vmem:[#allocation3 + $0x49] sm:$0xff]
        %v313 = vld [vmem:[#allocation3 + $0x51] sm:$0xff]
        %v314 = vmax.f32 %v298, %v306
        %v315 = vmax.f32 %v299, %v307
        %v316 = vmax.f32 %v300, %v308
        %v317 = vmax.f32 %v301, %v309
        %v318 = vmax.f32 %v302, %v310
        %v319 = vmax.f32 %v303, %v311
        %v320 = vmax.f32 %v304, %v312
        %v321 = vmax.f32 %v305, %v313
        %v322 = vld [vmem:[#allocation3 + $0x2] sm:$0xff]
        %v323 = vld [vmem:[#allocation3 + $0xa] sm:$0xff]
        %v324 = vld [vmem:[#allocation3 + $0x1a] sm:$0xff]
        %v325 = vld [vmem:[#allocation3 + $0x22] sm:$0xff]
        %v326 = vld [vmem:[#allocation3 + $0x32] sm:$0xff]
        %v327 = vld [vmem:[#allocation3 + $0x3a] sm:$0xff]
        %v328 = vld [vmem:[#allocation3 + $0x4a] sm:$0xff]
        %v329 = vld [vmem:[#allocation3 + $0x52] sm:$0xff]
        %v330 = vmax.f32 %v314, %v322
        %v331 = vmax.f32 %v315, %v323
        %v332 = vmax.f32 %v316, %v324
        %v333 = vmax.f32 %v317, %v325
        %v334 = vmax.f32 %v318, %v326
        %v335 = vmax.f32 %v319, %v327
        %v336 = vmax.f32 %v320, %v328
        %v337 = vmax.f32 %v321, %v329
        %338 = vst.msk [vmem:[%s135] sm:$0xff] %vm276, %v330
        %339 = vst.msk [vmem:[%s135 + $0x8] sm:$0xff] %vm276, %v331
        %340 = vst.msk [vmem:[%s135 + $0x10] sm:$0xff] %vm276, %v332
        %341 = vst.msk [vmem:[%s135 + $0x18] sm:$0xff] %vm276, %v333
        %342 = vst.msk [vmem:[%s135 + $0x20] sm:$0xff] %vm276, %v334
        %343 = vst.msk [vmem:[%s135 + $0x28] sm:$0xff] %vm276, %v335
        %344 = vst.msk [vmem:[%s135 + $0x30] sm:$0xff] %vm276, %v336
        %345 = vst.msk [vmem:[%s135 + $0x38] sm:$0xff] %vm276, %v337
        %s346 = sand.u32 %s52, 1
        %s347 = scalar_lea.sflag [#allocation6], %s346
        %s348 = sand.u32 %s52, 1
        %s349 = smul.addr %s348, 64
        %s350 = scalar_lea.vmem [#allocation7], %s349
        // Predicated region
        $region29: #{tpu_custom_call.1} parent=23 // pred_check
          %p351 = pneg %p62
        $region30: #{tpu_custom_call.1} parent=23 // pred_check_branch
          %353 = sbr.rel (%p351) target = $region32
        $region31: #{tpu_custom_call.1} parent=23 // pred_region
          %s354 = smul.u32 4, %s18
          %s356 = ssub.s32 1024, 1024
          %357 = vsyncadd %s347, %s356
          %s358 = smul.addr %s354, 2
          %s359 = smul.addr %s358, 128
          %s360 = scalar_lea.hbm %s1, %s359
          %s361 = sshll.u32 %s350, 4
          %s362 = int_to_ptr.vmem [resolvable:$true] %s361
          %367 = dma.vmem_to_hbm [thread:$0]  %s362, 1024, %s360, %s347, 128, 128, 8
        $region32: #{tpu_custom_call.1} parent=23 // pred_fallthru
          _
      $region24: #{tpu_custom_call.1} parent=5 // pred_fallthru
        _
      %p368 = scmp.le.s32.totalorder 2, %s13
      // Predicated region
      $region33: #{tpu_custom_call.1} parent=5 // pred_check
        %p369 = pneg %p368
      $region34: #{tpu_custom_call.1} parent=5 // pred_check_branch
        %371 = sbr.rel (%p369) target = $region36
      $region35: #{tpu_custom_call.1} parent=5 // pred_region
        %s372 = ssub.s32 %s13, 2
        // Predicated region
        $region37: #{tpu_custom_call.1} parent=35 // pred_check
          %p373 = pneg %p68
        $region38: #{tpu_custom_call.1} parent=35 // pred_check_branch
          %375 = sbr.rel (%p373) target = $region40
        $region39: #{tpu_custom_call.1} parent=35 // pred_region
          %s376 = sand.u32 %s53, 1
          %s377 = scalar_lea.sflag [#allocation6], %s376
          %s378 = sand.u32 %s53, 1
          %s379 = smul.addr %s378, 64
          %s380 = scalar_lea.vmem [#allocation7], %s379
          %381 = dma.done %s377, 1024
        $region40: #{tpu_custom_call.1} parent=35 // pred_fallthru
          _
      $region36: #{tpu_custom_call.1} parent=5 // pred_fallthru
        _
    $region6: #{tpu_custom_call.1} parent=1 // loop_footer
      %s17 = sadd.s32 1, %s13
    $region7: #{tpu_custom_call.1} parent=1 // loop_footer_branch
      %12 = sbr.rel target = $region3
    $region8: #{tpu_custom_call.1} parent=1 // loop_exit
      _
    %382 = vsyncpa [#allocation5], 1
    %s383 = scalar_lea.sflag [#allocation5], 1
    %384 = vsyncpa %s383, 1
    %385 = vsyncpa [#allocation6], 1
    %s386 = scalar_lea.sflag [#allocation6], 1
    %387 = vsyncpa %s386, 1

</llo_original>
